<compile_context>
chip_gen: v6e
topology: v6e:2x2x1
jax: 0.10.0
libtpu: 0.0.40
codegen_flags: <defaults>
</compile_context>

<pallas_src>
import functools

import jax
import jax.numpy as jnp
from jax import lax
from jax.experimental import pallas as pl
from jax.experimental.pallas import tpu as pltpu


def _sepconv_kernel(x_ref, wdw_ref, wpw_ref, scale_ref, shift_ref, mask_ref,
                    o_ref, *, stride: int, h: int, w: int, h_out: int,
                    w_out: int):
    """One image per grid step.

    x_ref    : (1, Cin, H*W)   flattened NCHW input tile (lane-dense)
    wdw_ref  : (9, Cin, 1)     depthwise 3x3 weights, tap-major (dh-major)
    wpw_ref  : (Cout, Cin)     pointwise weights (bf16 or f32)
    scale_ref: (Cout, 1)       folded BN scale
    shift_ref: (Cout, 1)       folded BN shift (incl. both conv biases)
    mask_ref : (4, H*W)        0/1 masks: [row>0, row<H-1, col>0, col<W-1]
    o_ref    : (1, Cout, H_out*W_out)
    """
    cin = x_ref.shape[1]
    hw = h * w

    x = x_ref[0].astype(jnp.float32)                       # (Cin, H*W)

    m_up, m_down = mask_ref[0:1], mask_ref[1:2]             # (1, HW) each
    m_left, m_right = mask_ref[2:3], mask_ref[3:4]

    def lane_roll(v, shift):
        # roll(v, s)[p] == v[(p - s) % hw]; we want tap[p] = v[p + off],
        # i.e. shift = -off (always passed non-negative via the modulo).
        shift %= hw
        return v if shift == 0 else pltpu.roll(v, shift, axis=1)

    # Row-shifted (dh = -1, 0, +1), row-masked copies.  Wrap garbage from the
    # flat roll lands only in the masked rows.
    rows = (lane_roll(x, w) * m_up,        # dh = -1 (row above)
            x,                             # dh =  0
            lane_roll(x, -w) * m_down)     # dh = +1 (row below)

    # Depthwise 3x3: 9 taps = column rolls of the row-shifted copies (XLU),
    # FMA'd on the VPU; column-wrap garbage zeroed per dw group.
    acc = jnp.zeros((cin, hw), jnp.float32)
    for kdw, dw in enumerate((-1, 0, 1)):
        part = jnp.zeros((cin, hw), jnp.float32)
        for kdh in range(3):
            tap = lane_roll(rows[kdh], -dw)
            part = part + tap * wdw_ref[kdh * 3 + kdw]       # (Cin,1) broadcast
        if dw == -1:
            part = part * m_left
        elif dw == 1:
            part = part * m_right
        acc = acc + part

    if stride > 1:
        # TODO(synk): full-res depthwise + subsample; stride-phased taps would
        # make this cost the same per output pixel as stride=1.
        acc = acc.reshape(cin, h, w)[:, ::stride, ::stride]
        acc = acc.reshape(cin, h_out * w_out)

    # Pointwise 1x1 conv: (Cout,Cin) @ (Cin, HW_out) — MXU fed in wpw's dtype
    # (bf16 by default), f32 accumulation, lane-dense output.
    y = jnp.dot(wpw_ref[...], acc.astype(wpw_ref.dtype),
                preferred_element_type=jnp.float32)
    # Folded BatchNorm(eval) + both conv biases, then ReLU.
    y = y * scale_ref[...] + shift_ref[...]
    o_ref[0] = jnp.maximum(y, 0.0).astype(o_ref.dtype)


def separable_conv2d(x_nchw, params, *, stride: int = 1, eps: float = 1e-5,
                     mxu_bf16: bool = True):
    """Forward pass of SeparableConv2d (eval-mode BN). NCHW in / NCHW out."""
    w_dw, b_dw, w_pw, b_pw, gamma, beta, run_mean, run_var = params

    n, cin, h, w = x_nchw.shape
    cout = w_pw.shape[0]
    h_out = (h - 1) // stride + 1
    w_out = (w - 1) // stride + 1
    hw = h * w
    hw_out = h_out * w_out

    # Free contiguous reshape: NCHW -> (N, C, H*W). No transpose, no pad.
    x_flat = x_nchw.reshape(n, cin, hw)

    # --- tiny parameter plumbing (constant per call) -------------------------
    # PyTorch depthwise weight (Cin,1,3,3) -> tap-major (9, Cin, 1), f32.
    wdw = jnp.transpose(w_dw[:, 0, :, :], (1, 2, 0)).reshape(9, cin)
    wdw = wdw[..., None].astype(jnp.float32)
    # PyTorch pointwise weight (Cout,Cin,1,1) -> (Cout,Cin).
    wpw_f32 = w_pw[:, :, 0, 0].astype(jnp.float32)
    wpw = wpw_f32.astype(jnp.bfloat16) if mxu_bf16 else wpw_f32
    # Fold depthwise bias + pointwise bias + eval-mode BN into scale/shift.
    scale = (gamma / jnp.sqrt(run_var + eps)).astype(jnp.float32)       # (Cout,)
    shift = (beta.astype(jnp.float32)
             + (b_pw.astype(jnp.float32)
                + wpw_f32 @ b_dw.astype(jnp.float32)
                - run_mean.astype(jnp.float32)) * scale)                # (Cout,)
    scale2 = scale[:, None]                                             # (Cout,1)
    shift2 = shift[:, None]                                             # (Cout,1)

    # Precomputed boundary masks (replaces per-step iota % W + compares).
    ri = jnp.repeat(jnp.arange(h, dtype=jnp.int32), w)
    ci = jnp.tile(jnp.arange(w, dtype=jnp.int32), h)
    masks = jnp.stack([ri >= 1, ri <= h - 2, ci >= 1, ci <= w - 2]
                      ).astype(jnp.float32)                             # (4, HW)

    kernel = functools.partial(_sepconv_kernel, stride=stride, h=h, w=w,
                               h_out=h_out, w_out=w_out)

    out_dtype = x_nchw.dtype
    in_item = jnp.dtype(x_nchw.dtype).itemsize
    out_item = jnp.dtype(out_dtype).itemsize

    # Explicit scoped-VMEM limit (v5e defaults to 16 MiB). Rough per-step bound:
    # double-buffered in/out blocks + f32 temporaries (x, rows, taps, acc, y).
    vmem_est = (2 * cin * hw * in_item
                + 2 * cout * hw_out * out_item
                + 9 * cin * hw * 4
                + 2 * cout * hw_out * 4
                + (9 * cin * 128 + cout * cin + 2 * cout * 128 + 4 * hw) * 4
                + (4 << 20))
    vmem_limit = int(min(max(vmem_est, 32 << 20), 96 << 20))
    # TODO(synk): on v7x (64 MiB physical VMEM) re-derive with H-strip tiling.

    cost = pl.CostEstimate(
        flops=int(n * (2 * 9 * cin * hw
                       + 2 * cin * cout * hw_out
                       + 3 * cout * hw_out)),
        transcendentals=0,
        bytes_accessed=int(n * cin * hw * in_item
                           + n * cout * hw_out * out_item
                           + (wdw.size + scale2.size + shift2.size
                              + masks.size) * 4
                           + wpw.size * jnp.dtype(wpw.dtype).itemsize))

    out_flat = pl.pallas_call(
        kernel,
        out_shape=jax.ShapeDtypeStruct((n, cout, hw_out), out_dtype),
        grid_spec=pltpu.PrefetchScalarGridSpec(
            num_scalar_prefetch=0,
            grid=(n,),
            in_specs=[
                pl.BlockSpec((1, cin, hw), lambda i: (i, 0, 0)),
                pl.BlockSpec((9, cin, 1), lambda i: (0, 0, 0)),
                pl.BlockSpec((cout, cin), lambda i: (0, 0)),
                pl.BlockSpec((cout, 1), lambda i: (0, 0)),
                pl.BlockSpec((cout, 1), lambda i: (0, 0)),
                pl.BlockSpec((4, hw), lambda i: (0, 0)),
            ],
            out_specs=pl.BlockSpec((1, cout, hw_out), lambda i: (i, 0, 0)),
        ),
        compiler_params=pltpu.CompilerParams(
            dimension_semantics=("parallel",),
            vmem_limit_bytes=vmem_limit),
        cost_estimate=cost,
    )(x_flat, wdw, wpw, scale2, shift2, masks)

    # Free contiguous reshape back to NCHW.
    return out_flat.reshape(n, cout, h_out, w_out)


def _reference(x_nchw, params, *, stride=1, eps=1e-5):
    """Plain-JAX reference (matches PyTorch SeparableConv2d in eval mode)."""
    w_dw, b_dw, w_pw, b_pw, gamma, beta, run_mean, run_var = params
    cin = x_nchw.shape[1]
    dn = lax.conv_dimension_numbers(x_nchw.shape, w_dw.shape,
                                    ("NCHW", "OIHW", "NCHW"))
    y = lax.conv_general_dilated(x_nchw, w_dw, (stride, stride),
                                 ((1, 1), (1, 1)), dimension_numbers=dn,
                                 feature_group_count=cin,
                                 precision=lax.Precision.HIGHEST)
    y = y + b_dw[None, :, None, None]
    dn2 = lax.conv_dimension_numbers(y.shape, w_pw.shape,
                                     ("NCHW", "OIHW", "NCHW"))
    y = lax.conv_general_dilated(y, w_pw, (1, 1), ((0, 0), (0, 0)),
                                 dimension_numbers=dn2,
                                 precision=lax.Precision.HIGHEST)
    y = y + b_pw[None, :, None, None]
    y = (y - run_mean[None, :, None, None]) / jnp.sqrt(
        run_var[None, :, None, None] + eps)
    y = gamma[None, :, None, None] * y + beta[None, :, None, None]
    return jnp.maximum(y, 0.0)


if __name__ == "__main__":
    # Small deterministic setup: N=2, Cin=4, Cout=8, H=W=16, stride=1.
    N, CIN, COUT, H, W = 2, 4, 8, 16, 16
    key = jax.random.PRNGKey(0)
    k = jax.random.split(key, 9)

    x = jax.random.normal(k[0], (N, CIN, H, W), dtype=jnp.float32)

    w_dw = 0.2 * jax.random.normal(k[1], (CIN, 1, 3, 3), dtype=jnp.float32)
    b_dw = 0.1 * jax.random.normal(k[2], (CIN,), dtype=jnp.float32)
    w_pw = 0.2 * jax.random.normal(k[3], (COUT, CIN, 1, 1), dtype=jnp.float32)
    b_pw = 0.1 * jax.random.normal(k[4], (COUT,), dtype=jnp.float32)
    gamma = 1.0 + 0.1 * jax.random.normal(k[5], (COUT,), dtype=jnp.float32)
    beta = 0.1 * jax.random.normal(k[6], (COUT,), dtype=jnp.float32)
    run_mean = 0.1 * jax.random.normal(k[7], (COUT,), dtype=jnp.float32)
    run_var = jnp.abs(1.0 + 0.1 * jax.random.normal(k[8], (COUT,),
                                                    dtype=jnp.float32))
    params = (w_dw, b_dw, w_pw, b_pw, gamma, beta, run_mean, run_var)

    ref = jax.block_until_ready(_reference(x, params, stride=1))

    # 1) Default path: f32 input, bf16-fed MXU (f32 accumulate).
    out = jax.block_until_ready(separable_conv2d(x, params, stride=1))
    assert out.shape == (N, COUT, H, W), out.shape
    assert jnp.allclose(out, ref, atol=3e-2, rtol=3e-2), (
        float(jnp.max(jnp.abs(out - ref))))

    # 2) Full-precision MXU path.
    out32 = jax.block_until_ready(
        separable_conv2d(x, params, stride=1, mxu_bf16=False))
    assert jnp.allclose(out32, ref, atol=5e-3, rtol=5e-3), (
        float(jnp.max(jnp.abs(out32 - ref))))

    # 3) bf16 input path (dtype-preserving: bf16 in -> bf16 out).
    xb = x.astype(jnp.bfloat16)
    outb = jax.block_until_ready(separable_conv2d(xb, params, stride=1))
    assert outb.dtype == jnp.bfloat16, outb.dtype
    assert jnp.allclose(outb.astype(jnp.float32), ref, atol=5e-2, rtol=5e-2), (
        float(jnp.max(jnp.abs(outb.astype(jnp.float32) - ref))))

    print("KERNEL_OK")
</pallas_src>

<mosaic_0001>
module attributes {stable_mosaic.version = 11 : i64} {
  func.func @_sepconv_kernel(%arg0: i32, %arg1: memref<1x4x256xf32, #tpu.memory_space<vmem>>, %arg2: memref<9x4x1xf32, #tpu.memory_space<vmem>>, %arg3: memref<8x4xbf16, #tpu.memory_space<vmem>>, %arg4: memref<8x1xf32, #tpu.memory_space<vmem>>, %arg5: memref<8x1xf32, #tpu.memory_space<vmem>>, %arg6: memref<4x256xf32, #tpu.memory_space<vmem>>, %arg7: memref<1x8x256xf32, #tpu.memory_space<vmem>>) attributes {dimension_semantics = [#tpu.dimension_semantics<parallel>], iteration_bounds = array<i64: 2>, scalar_prefetch = 0 : i64, scratch_operands = 0 : i64, tpu.core_type = #tpu.core_type<tc>, window_params = [{transform_indices = @transform_0, window_bounds = array<i64: 1, 4, 256>}, {pipeline_mode = #tpu.pipeline_mode<synchronous>, transform_indices = @transform_1, window_bounds = array<i64: 9, 4, 1>}, {pipeline_mode = #tpu.pipeline_mode<synchronous>, transform_indices = @transform_2, window_bounds = array<i64: 8, 4>}, {pipeline_mode = #tpu.pipeline_mode<synchronous>, transform_indices = @transform_3, window_bounds = array<i64: 8, 1>}, {pipeline_mode = #tpu.pipeline_mode<synchronous>, transform_indices = @transform_4, window_bounds = array<i64: 8, 1>}, {pipeline_mode = #tpu.pipeline_mode<synchronous>, transform_indices = @transform_5, window_bounds = array<i64: 4, 256>}, {transform_indices = @transform_6, window_bounds = array<i64: 1, 8, 256>}]} {
    %c0 = arith.constant 0 : index
    %c0_0 = arith.constant 0 : index
    %c0_1 = arith.constant 0 : index
    %0 = vector.load %arg1[%c0, %c0_0, %c0_1] : memref<1x4x256xf32, #tpu.memory_space<vmem>>, vector<1x4x256xf32>
    %1 = vector.shape_cast %0 : vector<1x4x256xf32> to vector<4x256xf32>
    %c0_2 = arith.constant 0 : index
    %c0_3 = arith.constant 0 : index
    %2 = vector.load %arg6[%c0_2, %c0_3] : memref<4x256xf32, #tpu.memory_space<vmem>>, vector<1x256xf32>
    %c1 = arith.constant 1 : index
    %c0_4 = arith.constant 0 : index
    %3 = vector.load %arg6[%c1, %c0_4] : memref<4x256xf32, #tpu.memory_space<vmem>>, vector<1x256xf32>
    %c2 = arith.constant 2 : index
    %c0_5 = arith.constant 0 : index
    %4 = vector.load %arg6[%c2, %c0_5] : memref<4x256xf32, #tpu.memory_space<vmem>>, vector<1x256xf32>
    %c3 = arith.constant 3 : index
    %c0_6 = arith.constant 0 : index
    %5 = vector.load %arg6[%c3, %c0_6] : memref<4x256xf32, #tpu.memory_space<vmem>>, vector<1x256xf32>
    %c16_i32 = arith.constant 16 : i32
    %6 = tpu.dynamic_rotate %1 by %c16_i32 dim 1 : vector<4x256xf32>, i32 -> vector<4x256xf32>
    %7 = vector.broadcast %2 : vector<1x256xf32> to vector<4x256xf32>
    %8 = arith.mulf %6, %7 : vector<4x256xf32>
    %c240_i32 = arith.constant 240 : i32
    %9 = tpu.dynamic_rotate %1 by %c240_i32 dim 1 : vector<4x256xf32>, i32 -> vector<4x256xf32>
    %10 = vector.broadcast %3 : vector<1x256xf32> to vector<4x256xf32>
    %11 = arith.mulf %9, %10 : vector<4x256xf32>
    %cst = arith.constant 0.000000e+00 : f32
    %12 = vector.broadcast %cst : f32 to vector<4x256xf32>
    %cst_7 = arith.constant 0.000000e+00 : f32
    %13 = vector.broadcast %cst_7 : f32 to vector<4x256xf32>
    %c1_i32 = arith.constant 1 : i32
    %14 = tpu.dynamic_rotate %8 by %c1_i32 dim 1 : vector<4x256xf32>, i32 -> vector<4x256xf32>
    %c0_8 = arith.constant 0 : index
    %c0_9 = arith.constant 0 : index
    %c0_10 = arith.constant 0 : index
    %15 = vector.load %arg2[%c0_8, %c0_9, %c0_10] : memref<9x4x1xf32, #tpu.memory_space<vmem>>, vector<1x4x1xf32>
    %16 = vector.shape_cast %15 : vector<1x4x1xf32> to vector<4x1xf32>
    %17 = vector.broadcast %16 : vector<4x1xf32> to vector<4x256xf32>
    %18 = arith.mulf %14, %17 : vector<4x256xf32>
    %19 = arith.addf %13, %18 : vector<4x256xf32>
    %c1_i32_11 = arith.constant 1 : i32
    %20 = tpu.dynamic_rotate %1 by %c1_i32_11 dim 1 : vector<4x256xf32>, i32 -> vector<4x256xf32>
    %c3_12 = arith.constant 3 : index
    %c0_13 = arith.constant 0 : index
    %c0_14 = arith.constant 0 : index
    %21 = vector.load %arg2[%c3_12, %c0_13, %c0_14] : memref<9x4x1xf32, #tpu.memory_space<vmem>>, vector<1x4x1xf32>
    %22 = vector.shape_cast %21 : vector<1x4x1xf32> to vector<4x1xf32>
    %23 = vector.broadcast %22 : vector<4x1xf32> to vector<4x256xf32>
    %24 = arith.mulf %20, %23 : vector<4x256xf32>
    %25 = arith.addf %19, %24 : vector<4x256xf32>
    %c1_i32_15 = arith.constant 1 : i32
    %26 = tpu.dynamic_rotate %11 by %c1_i32_15 dim 1 : vector<4x256xf32>, i32 -> vector<4x256xf32>
    %c6 = arith.constant 6 : index
    %c0_16 = arith.constant 0 : index
    %c0_17 = arith.constant 0 : index
    %27 = vector.load %arg2[%c6, %c0_16, %c0_17] : memref<9x4x1xf32, #tpu.memory_space<vmem>>, vector<1x4x1xf32>
    %28 = vector.shape_cast %27 : vector<1x4x1xf32> to vector<4x1xf32>
    %29 = vector.broadcast %28 : vector<4x1xf32> to vector<4x256xf32>
    %30 = arith.mulf %26, %29 : vector<4x256xf32>
    %31 = arith.addf %25, %30 : vector<4x256xf32>
    %32 = vector.broadcast %4 : vector<1x256xf32> to vector<4x256xf32>
    %33 = arith.mulf %31, %32 : vector<4x256xf32>
    %34 = arith.addf %12, %33 : vector<4x256xf32>
    %cst_18 = arith.constant 0.000000e+00 : f32
    %35 = vector.broadcast %cst_18 : f32 to vector<4x256xf32>
    %c1_19 = arith.constant 1 : index
    %c0_20 = arith.constant 0 : index
    %c0_21 = arith.constant 0 : index
    %36 = vector.load %arg2[%c1_19, %c0_20, %c0_21] : memref<9x4x1xf32, #tpu.memory_space<vmem>>, vector<1x4x1xf32>
    %37 = vector.shape_cast %36 : vector<1x4x1xf32> to vector<4x1xf32>
    %38 = vector.broadcast %37 : vector<4x1xf32> to vector<4x256xf32>
    %39 = arith.mulf %8, %38 : vector<4x256xf32>
    %40 = arith.addf %35, %39 : vector<4x256xf32>
    %c4 = arith.constant 4 : index
    %c0_22 = arith.constant 0 : index
    %c0_23 = arith.constant 0 : index
    %41 = vector.load %arg2[%c4, %c0_22, %c0_23] : memref<9x4x1xf32, #tpu.memory_space<vmem>>, vector<1x4x1xf32>
    %42 = vector.shape_cast %41 : vector<1x4x1xf32> to vector<4x1xf32>
    %43 = vector.broadcast %42 : vector<4x1xf32> to vector<4x256xf32>
    %44 = arith.mulf %1, %43 : vector<4x256xf32>
    %45 = arith.addf %40, %44 : vector<4x256xf32>
    %c7 = arith.constant 7 : index
    %c0_24 = arith.constant 0 : index
    %c0_25 = arith.constant 0 : index
    %46 = vector.load %arg2[%c7, %c0_24, %c0_25] : memref<9x4x1xf32, #tpu.memory_space<vmem>>, vector<1x4x1xf32>
    %47 = vector.shape_cast %46 : vector<1x4x1xf32> to vector<4x1xf32>
    %48 = vector.broadcast %47 : vector<4x1xf32> to vector<4x256xf32>
    %49 = arith.mulf %11, %48 : vector<4x256xf32>
    %50 = arith.addf %45, %49 : vector<4x256xf32>
    %51 = arith.addf %34, %50 : vector<4x256xf32>
    %cst_26 = arith.constant 0.000000e+00 : f32
    %52 = vector.broadcast %cst_26 : f32 to vector<4x256xf32>
    %c255_i32 = arith.constant 255 : i32
    %53 = tpu.dynamic_rotate %8 by %c255_i32 dim 1 : vector<4x256xf32>, i32 -> vector<4x256xf32>
    %c2_27 = arith.constant 2 : index
    %c0_28 = arith.constant 0 : index
    %c0_29 = arith.constant 0 : index
    %54 = vector.load %arg2[%c2_27, %c0_28, %c0_29] : memref<9x4x1xf32, #tpu.memory_space<vmem>>, vector<1x4x1xf32>
    %55 = vector.shape_cast %54 : vector<1x4x1xf32> to vector<4x1xf32>
    %56 = vector.broadcast %55 : vector<4x1xf32> to vector<4x256xf32>
    %57 = arith.mulf %53, %56 : vector<4x256xf32>
    %58 = arith.addf %52, %57 : vector<4x256xf32>
    %c255_i32_30 = arith.constant 255 : i32
    %59 = tpu.dynamic_rotate %1 by %c255_i32_30 dim 1 : vector<4x256xf32>, i32 -> vector<4x256xf32>
    %c5 = arith.constant 5 : index
    %c0_31 = arith.constant 0 : index
    %c0_32 = arith.constant 0 : index
    %60 = vector.load %arg2[%c5, %c0_31, %c0_32] : memref<9x4x1xf32, #tpu.memory_space<vmem>>, vector<1x4x1xf32>
    %61 = vector.shape_cast %60 : vector<1x4x1xf32> to vector<4x1xf32>
    %62 = vector.broadcast %61 : vector<4x1xf32> to vector<4x256xf32>
    %63 = arith.mulf %59, %62 : vector<4x256xf32>
    %64 = arith.addf %58, %63 : vector<4x256xf32>
    %c255_i32_33 = arith.constant 255 : i32
    %65 = tpu.dynamic_rotate %11 by %c255_i32_33 dim 1 : vector<4x256xf32>, i32 -> vector<4x256xf32>
    %c8 = arith.constant 8 : index
    %c0_34 = arith.constant 0 : index
    %c0_35 = arith.constant 0 : index
    %66 = vector.load %arg2[%c8, %c0_34, %c0_35] : memref<9x4x1xf32, #tpu.memory_space<vmem>>, vector<1x4x1xf32>
    %67 = vector.shape_cast %66 : vector<1x4x1xf32> to vector<4x1xf32>
    %68 = vector.broadcast %67 : vector<4x1xf32> to vector<4x256xf32>
    %69 = arith.mulf %65, %68 : vector<4x256xf32>
    %70 = arith.addf %64, %69 : vector<4x256xf32>
    %71 = vector.broadcast %5 : vector<1x256xf32> to vector<4x256xf32>
    %72 = arith.mulf %70, %71 : vector<4x256xf32>
    %73 = arith.addf %51, %72 : vector<4x256xf32>
    %c0_36 = arith.constant 0 : index
    %c0_37 = arith.constant 0 : index
    %74 = vector.load %arg3[%c0_36, %c0_37] : memref<8x4xbf16, #tpu.memory_space<vmem>>, vector<8x4xbf16>
    %75 = arith.truncf %73 : vector<4x256xf32> to vector<4x256xbf16>
    %cst_38 = arith.constant dense<0.000000e+00> : vector<8x256xf32>
    %76 = tpu.matmul %74, %75, %cst_38 {dimension_numbers = #tpu.dot_dimension_numbers<[1], [0], [0], [1], [0, 0, 1, 1], [], []>} : vector<8x4xbf16>, vector<4x256xbf16>, vector<8x256xf32> -> vector<8x256xf32>
    %c0_39 = arith.constant 0 : index
    %c0_40 = arith.constant 0 : index
    %77 = vector.load %arg4[%c0_39, %c0_40] : memref<8x1xf32, #tpu.memory_space<vmem>>, vector<8x1xf32>
    %78 = vector.broadcast %77 : vector<8x1xf32> to vector<8x256xf32>
    %79 = arith.mulf %76, %78 : vector<8x256xf32>
    %c0_41 = arith.constant 0 : index
    %c0_42 = arith.constant 0 : index
    %80 = vector.load %arg5[%c0_41, %c0_42] : memref<8x1xf32, #tpu.memory_space<vmem>>, vector<8x1xf32>
    %81 = vector.broadcast %80 : vector<8x1xf32> to vector<8x256xf32>
    %82 = arith.addf %79, %81 : vector<8x256xf32>
    %cst_43 = arith.constant 0.000000e+00 : f32
    %83 = vector.broadcast %cst_43 : f32 to vector<8x256xf32>
    %84 = arith.maximumf %82, %83 : vector<8x256xf32>
    %c0_44 = arith.constant 0 : index
    %c0_45 = arith.constant 0 : index
    %c0_46 = arith.constant 0 : index
    %85 = vector.load %arg7[%c0_44, %c0_45, %c0_46] : memref<1x8x256xf32, #tpu.memory_space<vmem>>, vector<1x8x256xf32>
    %86 = vector.shape_cast %85 : vector<1x8x256xf32> to vector<8x256xf32>
    %87 = vector.shape_cast %84 : vector<8x256xf32> to vector<1x8x256xf32>
    tpu.vector_store %arg7[%c0_44, %c0_45, %c0_46], %87 {strides = array<i32>} : memref<1x8x256xf32, #tpu.memory_space<vmem>>, vector<1x8x256xf32>,
    return
  }
  func.func @transform_0(%arg0: i32) -> (i32, i32, i32) {
    %c0_i32 = arith.constant 0 : i32
    %c0_i32_0 = arith.constant 0 : i32
    %c0_i32_1 = arith.constant 0 : i32
    return %arg0, %c0_i32, %c0_i32_0 : i32, i32, i32
  }
  func.func @transform_1(%arg0: i32) -> (i32, i32, i32) {
    %c0_i32 = arith.constant 0 : i32
    %c0_i32_0 = arith.constant 0 : i32
    %c0_i32_1 = arith.constant 0 : i32
    %c0_i32_2 = arith.constant 0 : i32
    return %c0_i32, %c0_i32_0, %c0_i32_1 : i32, i32, i32
  }
  func.func @transform_2(%arg0: i32) -> (i32, i32) {
    %c0_i32 = arith.constant 0 : i32
    %c0_i32_0 = arith.constant 0 : i32
    %c0_i32_1 = arith.constant 0 : i32
    return %c0_i32, %c0_i32_0 : i32, i32
  }
  func.func @transform_3(%arg0: i32) -> (i32, i32) {
    %c0_i32 = arith.constant 0 : i32
    %c0_i32_0 = arith.constant 0 : i32
    %c0_i32_1 = arith.constant 0 : i32
    return %c0_i32, %c0_i32_0 : i32, i32
  }
  func.func @transform_4(%arg0: i32) -> (i32, i32) {
    %c0_i32 = arith.constant 0 : i32
    %c0_i32_0 = arith.constant 0 : i32
    %c0_i32_1 = arith.constant 0 : i32
    return %c0_i32, %c0_i32_0 : i32, i32
  }
  func.func @transform_5(%arg0: i32) -> (i32, i32) {
    %c0_i32 = arith.constant 0 : i32
    %c0_i32_0 = arith.constant 0 : i32
    %c0_i32_1 = arith.constant 0 : i32
    return %c0_i32, %c0_i32_0 : i32, i32
  }
  func.func @transform_6(%arg0: i32) -> (i32, i32, i32) {
    %c0_i32 = arith.constant 0 : i32
    %c0_i32_0 = arith.constant 0 : i32
    %c0_i32_1 = arith.constant 0 : i32
    return %arg0, %c0_i32, %c0_i32_0 : i32, i32, i32
  }
}

</mosaic_0001>

<llo_original>
// kernel: tpu_custom_call.1
$region0: #{tpu_custom_call.1}
  #allocation0 [shape = 'u32[]', space=smem, size = 0x4, offset = 0x4, fixed_abs, tag = 'smem constant byte address 0x4 - core index']
  #allocation1 [shape = 'u32[144,128]{1,0:T(1,128)}', space=vmem, size = 0x12000, scoped, tag = 'internal scratch']
  %s0 = inlined_call_operand.vmem [shape: f32[2,4,256], index: 0, kind: input, shape index: {}]
  %s1 = inlined_call_operand.vmem [shape: f32[9,4,1], index: 1, kind: input, shape index: {}]
  %s2 = inlined_call_operand.vmem [shape: bf16[8,4], index: 2, kind: input, shape index: {}]
  %s3 = inlined_call_operand.vmem [shape: f32[8,1], index: 3, kind: input, shape index: {}]
  %s4 = inlined_call_operand.vmem [shape: f32[8,1], index: 4, kind: input, shape index: {}]
  %s5 = inlined_call_operand.vmem [shape: f32[4,256], index: 5, kind: input, shape index: {}]
  %s6 = inlined_call_operand.hbm [shape: f32[2,8,256], index: 6, kind: output, shape index: {}]
  %s7 = sld [smem:[#allocation0]]
  $region57: #{tpu_custom_call.1} parent=0
    _
  %s9 = ssub.s32 1, %s7
  %s10 = scalar_select 0, %s9, %s7
  $region1: #{tpu_custom_call.1} parent=0
    #allocation2 [shape = 'u8[16384]{0}', space=vmem, size = 0x4000, scoped, tag = 'output window, operand 0']
    #allocation3 [shape = 's32[2]{0}', space=sflag, size = 0x8, scoped, tag = 'scoped memory for tpu_custom_call.1']
    %11 = vsyncpa [#allocation3], 0
    %s12 = scalar_lea.sflag [#allocation3], 1
    %13 = vsyncpa %s12, 0
    loop: start=0, step=1, limit=4
    $region2: #{tpu_custom_call.1} parent=1 // loop_pre_header
      _
    $region3: #{tpu_custom_call.1} parent=1 // loop_header
      %s15 = sphi 0, %s19
      %p16 = scmp.ge.s32.totalorder %s15, 4
      %s25 = sphi 0, %s27
      %s28 = sphi 0, %s25
      %s29 = sphi 0, %s28
      %s45 = sphi 0, %s29
      %s49 = sphi 0, %s49
      %s51 = sphi 0, %s49
      %s52 = sphi 0, %s51
      %s66 = sphi 0, %s52
      %s70 = sphi 0, %s70
      %s72 = sphi 0, %s70
      %s73 = sphi 0, %s72
      %s87 = sphi 0, %s73
      %s91 = sphi 0, %s91
      %s93 = sphi 0, %s91
      %s94 = sphi 0, %s93
      %s108 = sphi 0, %s94
      %s112 = sphi 0, %s112
      %s114 = sphi 0, %s112
      %s115 = sphi 0, %s114
      %s129 = sphi 0, %s115
      %s133 = sphi 0, %s133
      %s135 = sphi 0, %s133
      %s136 = sphi 0, %s135
      %s150 = sphi 0, %s136
      %s156 = sphi 0, %s158
      %s159 = sphi 0, %s156
      %s160 = sphi 0, %s159
      %s176 = sphi 0, %s160
    $region4: #{tpu_custom_call.1} parent=1 // loop_header_branch
      %18 = sbr.rel (%p16) target = $region8
    $region5: #{tpu_custom_call.1} parent=1 // loop_body
      %s20 = ssub.s32 %s15, 1
      %s21 = ssub.s32 %s15, 2
      %s22 = sadd.s32 %s15, 1
      %s23 = ssub.s32 %s15, %s22
      %p24 = scmp.eq.s32.totalorder %s23, 0
      %s26 = sadd.s32 %s25, 1
      %s27 = scalar_select %p24, %s25, %s26
      %p30 = pneg %p24
      %p31 = scmp.eq.s32.totalorder %s15, 1
      %p32 = por %p30, %p31
      %p33 = scmp.ne.s32.totalorder %s25, %s28
      %p34 = scmp.eq.s32.totalorder %s15, 0
      %p35 = por %p33, %p34
      %p36 = scmp.ne.s32.totalorder %s25, %s28
      %p37 = scmp.eq.s32.totalorder %s20, 1
      %p38 = por %p36, %p37
      %p39 = scmp.ne.s32.totalorder %s28, %s29
      %p40 = scmp.eq.s32.totalorder %s20, 0
      %p41 = por %p39, %p40
      %p42 = scmp.ne.s32.totalorder %s28, %s29
      %p43 = scmp.eq.s32.totalorder %s21, 1
      %p44 = por %p42, %p43
      %p46 = scmp.ne.s32.totalorder %s29, %s45
      %p47 = scmp.eq.s32.totalorder %s21, 0
      %p48 = por %p46, %p47
      %s50 = sadd.s32 %s49, 1
      %p53 = scmp.eq.s32.totalorder %s15, 1
      %p54 = scmp.ne.s32.totalorder %s49, %s51
      %p55 = scmp.eq.s32.totalorder %s15, 0
      %p56 = por %p54, %p55
      %p57 = scmp.ne.s32.totalorder %s49, %s51
      %p58 = scmp.eq.s32.totalorder %s20, 1
      %p59 = por %p57, %p58
      %p60 = scmp.ne.s32.totalorder %s51, %s52
      %p61 = scmp.eq.s32.totalorder %s20, 0
      %p62 = por %p60, %p61
      %p63 = scmp.ne.s32.totalorder %s51, %s52
      %p64 = scmp.eq.s32.totalorder %s21, 1
      %p65 = por %p63, %p64
      %p67 = scmp.ne.s32.totalorder %s52, %s66
      %p68 = scmp.eq.s32.totalorder %s21, 0
      %p69 = por %p67, %p68
      %s71 = sadd.s32 %s70, 1
      %p74 = scmp.eq.s32.totalorder %s15, 1
      %p75 = scmp.ne.s32.totalorder %s70, %s72
      %p76 = scmp.eq.s32.totalorder %s15, 0
      %p77 = por %p75, %p76
      %p78 = scmp.ne.s32.totalorder %s70, %s72
      %p79 = scmp.eq.s32.totalorder %s20, 1
      %p80 = por %p78, %p79
      %p81 = scmp.ne.s32.totalorder %s72, %s73
      %p82 = scmp.eq.s32.totalorder %s20, 0
      %p83 = por %p81, %p82
      %p84 = scmp.ne.s32.totalorder %s72, %s73
      %p85 = scmp.eq.s32.totalorder %s21, 1
      %p86 = por %p84, %p85
      %p88 = scmp.ne.s32.totalorder %s73, %s87
      %p89 = scmp.eq.s32.totalorder %s21, 0
      %p90 = por %p88, %p89
      %s92 = sadd.s32 %s91, 1
      %p95 = scmp.eq.s32.totalorder %s15, 1
      %p96 = scmp.ne.s32.totalorder %s91, %s93
      %p97 = scmp.eq.s32.totalorder %s15, 0
      %p98 = por %p96, %p97
      %p99 = scmp.ne.s32.totalorder %s91, %s93
      %p100 = scmp.eq.s32.totalorder %s20, 1
      %p101 = por %p99, %p100
      %p102 = scmp.ne.s32.totalorder %s93, %s94
      %p103 = scmp.eq.s32.totalorder %s20, 0
      %p104 = por %p102, %p103
      %p105 = scmp.ne.s32.totalorder %s93, %s94
      %p106 = scmp.eq.s32.totalorder %s21, 1
      %p107 = por %p105, %p106
      %p109 = scmp.ne.s32.totalorder %s94, %s108
      %p110 = scmp.eq.s32.totalorder %s21, 0
      %p111 = por %p109, %p110
      %s113 = sadd.s32 %s112, 1
      %p116 = scmp.eq.s32.totalorder %s15, 1
      %p117 = scmp.ne.s32.totalorder %s112, %s114
      %p118 = scmp.eq.s32.totalorder %s15, 0
      %p119 = por %p117, %p118
      %p120 = scmp.ne.s32.totalorder %s112, %s114
      %p121 = scmp.eq.s32.totalorder %s20, 1
      %p122 = por %p120, %p121
      %p123 = scmp.ne.s32.totalorder %s114, %s115
      %p124 = scmp.eq.s32.totalorder %s20, 0
      %p125 = por %p123, %p124
      %p126 = scmp.ne.s32.totalorder %s114, %s115
      %p127 = scmp.eq.s32.totalorder %s21, 1
      %p128 = por %p126, %p127
      %p130 = scmp.ne.s32.totalorder %s115, %s129
      %p131 = scmp.eq.s32.totalorder %s21, 0
      %p132 = por %p130, %p131
      %s134 = sadd.s32 %s133, 1
      %p137 = scmp.eq.s32.totalorder %s15, 1
      %p138 = scmp.ne.s32.totalorder %s133, %s135
      %p139 = scmp.eq.s32.totalorder %s15, 0
      %p140 = por %p138, %p139
      %p141 = scmp.ne.s32.totalorder %s133, %s135
      %p142 = scmp.eq.s32.totalorder %s20, 1
      %p143 = por %p141, %p142
      %p144 = scmp.ne.s32.totalorder %s135, %s136
      %p145 = scmp.eq.s32.totalorder %s20, 0
      %p146 = por %p144, %p145
      %p147 = scmp.ne.s32.totalorder %s135, %s136
      %p148 = scmp.eq.s32.totalorder %s21, 1
      %p149 = por %p147, %p148
      %p151 = scmp.ne.s32.totalorder %s136, %s150
      %p152 = scmp.eq.s32.totalorder %s21, 0
      %p153 = por %p151, %p152
      %s154 = ssub.s32 %s15, %s22
      %p155 = scmp.eq.s32.totalorder %s154, 0
      %s157 = sadd.s32 %s156, 1
      %s158 = scalar_select %p155, %s156, %s157
      %p161 = pneg %p155
      %p162 = scmp.eq.s32.totalorder %s15, 1
      %p163 = por %p161, %p162
      %p164 = scmp.ne.s32.totalorder %s156, %s159
      %p165 = scmp.eq.s32.totalorder %s15, 0
      %p166 = por %p164, %p165
      %p167 = scmp.ne.s32.totalorder %s156, %s159
      %p168 = scmp.eq.s32.totalorder %s20, 1
      %p169 = por %p167, %p168
      %p170 = scmp.ne.s32.totalorder %s159, %s160
      %p171 = scmp.eq.s32.totalorder %s20, 0
      %p172 = por %p170, %p171
      %p173 = scmp.ne.s32.totalorder %s159, %s160
      %p174 = scmp.eq.s32.totalorder %s21, 1
      %p175 = por %p173, %p174
      %p177 = scmp.ne.s32.totalorder %s160, %s176
      %p178 = scmp.eq.s32.totalorder %s21, 0
      %p179 = por %p177, %p178
      %p180 = scmp.le.s32.totalorder 1, %s15
      %p181 = scmp.lt.s32.totalorder %s15, 3
      %p182 = pnand %p180, %p181
      %p183 = pneg %p182
      // Predicated region
      $region9: #{tpu_custom_call.1} parent=5 // pred_check
        _
      $region10: #{tpu_custom_call.1} parent=5 // pred_check_branch
        %185 = sbr.rel (%p182) target = $region12
      $region11: #{tpu_custom_call.1} parent=5 // pred_region
        %s186 = ssub.s32 %s15, 1
        // Predicated region
        $region13: #{tpu_custom_call.1} parent=11 // pred_check
          %p187 = pneg %p62
        $region14: #{tpu_custom_call.1} parent=11 // pred_check_branch
          %189 = sbr.rel (%p187) target = $region16
        $region15: #{tpu_custom_call.1} parent=11 // pred_region
          _
        $region16: #{tpu_custom_call.1} parent=11 // pred_fallthru
          _
        // Predicated region
        $region17: #{tpu_custom_call.1} parent=11 // pred_check
          %p190 = pneg %p83
        $region18: #{tpu_custom_call.1} parent=11 // pred_check_branch
          %192 = sbr.rel (%p190) target = $region20
        $region19: #{tpu_custom_call.1} parent=11 // pred_region
          _
        $region20: #{tpu_custom_call.1} parent=11 // pred_fallthru
          _
        // Predicated region
        $region21: #{tpu_custom_call.1} parent=11 // pred_check
          %p193 = pneg %p104
        $region22: #{tpu_custom_call.1} parent=11 // pred_check_branch
          %195 = sbr.rel (%p193) target = $region24
        $region23: #{tpu_custom_call.1} parent=11 // pred_region
          _
        $region24: #{tpu_custom_call.1} parent=11 // pred_fallthru
          _
        // Predicated region
        $region25: #{tpu_custom_call.1} parent=11 // pred_check
          %p196 = pneg %p125
        $region26: #{tpu_custom_call.1} parent=11 // pred_check_branch
          %198 = sbr.rel (%p196) target = $region28
        $region27: #{tpu_custom_call.1} parent=11 // pred_region
          _
        $region28: #{tpu_custom_call.1} parent=11 // pred_fallthru
          _
        // Predicated region
        $region29: #{tpu_custom_call.1} parent=11 // pred_check
          %p199 = pneg %p146
        $region30: #{tpu_custom_call.1} parent=11 // pred_check_branch
          %201 = sbr.rel (%p199) target = $region32
        $region31: #{tpu_custom_call.1} parent=11 // pred_region
          _
        $region32: #{tpu_custom_call.1} parent=11 // pred_fallthru
          _
      $region12: #{tpu_custom_call.1} parent=5 // pred_fallthru
        _
      %p202 = scmp.lt.s32.totalorder %s15, 2
      // Predicated region
      $region33: #{tpu_custom_call.1} parent=5 // pred_check
        %p203 = pneg %p202
      $region34: #{tpu_custom_call.1} parent=5 // pred_check_branch
        %205 = sbr.rel (%p203) target = $region36
      $region35: #{tpu_custom_call.1} parent=5 // pred_region
        // Predicated region
        $region37: #{tpu_custom_call.1} parent=35 // pred_check
          %p206 = pneg %p35
        $region38: #{tpu_custom_call.1} parent=35 // pred_check_branch
          %208 = sbr.rel (%p206) target = $region40
        $region39: #{tpu_custom_call.1} parent=35 // pred_region
          %p209 = scmp.lt.s32.totalorder %s15, 1
          %s210 = scalar_select %p209, %s15, 1
          %s211 = smul.addr %s210, 2
          %s212 = smul.addr %s211, 4
          %s213 = scalar_lea.vmem %s0, %s212
        $region40: #{tpu_custom_call.1} parent=35 // pred_fallthru
          _
      $region36: #{tpu_custom_call.1} parent=5 // pred_fallthru
        _
      %p214 = scmp.le.s32.totalorder 1, %s15
      %p215 = scmp.lt.s32.totalorder %s15, 3
      %p216 = pnand %p214, %p215
      %p217 = pneg %p216
      // Predicated region
      $region41: #{tpu_custom_call.1} parent=5 // pred_check
        _
      $region42: #{tpu_custom_call.1} parent=5 // pred_check_branch
        %219 = sbr.rel (%p216) target = $region44
      $region43: #{tpu_custom_call.1} parent=5 // pred_region
        %s220 = ssub.s32 %s15, 1
        %p221 = scmp.lt.s32.totalorder %s20, 1
        %s222 = scalar_select %p221, %s20, 1
        %s223 = smul.addr %s222, 2
        %s224 = smul.addr %s223, 4
        %s225 = scalar_lea.vmem %s0, %s224
        %p226 = pneg %p41
        %p227 = pneg %p38
        %p228 = pneg %p62
        %p229 = pneg %p59
        %p230 = pneg %p83
        %p231 = pneg %p80
        %p232 = pneg %p104
        %p233 = pneg %p101
        %p234 = pneg %p125
        %p235 = pneg %p122
        %p236 = pneg %p146
        %p237 = pneg %p143
        %p238 = pneg %p172
        %p239 = pneg %p169
        %s240 = sand.u32 %s159, 1
        %s241 = scalar_lea.sflag [#allocation3], %s240
        %s242 = sand.u32 %s159, 1
        %s243 = smul.addr %s242, 16
        %s244 = scalar_lea.vmem [#allocation2], %s243
        %p245 = scmp.lt.s32.totalorder %s20, 1
        %s246 = scalar_select %p245, %s20, 1
        %s247 = smul.addr %s246, 2
        %s248 = smul.addr %s247, 4
        %s249 = scalar_lea.vmem %s0, %s248
        %v251 = vld [vmem:[%s249] sm:$0xff]
        %v252 = vld [vmem:[%s5] ss:$4 sm:$0x3]
        %s253 = scalar_lea.vmem %s5, 1
        %v254 = vld [vmem:[%s253] ss:$4 sm:$0x3]
        %s255 = scalar_lea.vmem %s5, 2
        %v256 = vld [vmem:[%s255] ss:$4 sm:$0x3]
        %s257 = scalar_lea.vmem %s5, 3
        %v258 = vld [vmem:[%s257] ss:$4 sm:$0x3]
        %v260 = vcombine.high %v251, %v251
        %262 = vrot.lane.b32.xlu0 %v251, 16
        %v263 = vpop.permute.xlu0 %262
        %264 = vrot.lane.b32.xlu0 %v260, 16
        %v265 = vpop.permute.xlu0 %264
        %v266 = vlaneseq
        %v267 = vand.u32 %v266, 127
        %vm268 = vcmp.lt.s32.totalorder %v267, 16
        %v269 = vsel %vm268, %v263, %v265
        %v270 = vsel %vm268, %v265, %v263
        %v272 = vlaneseq
        %v273 = vshrl.u32 %v272, 7
        %v274 = vsub.s32 0, %v273
        %v275 = vrot.slane %v252, %v274
        %v276 = vlaneseq
        %v277 = vshrl.u32 %v276, 7
        %v278 = vsub.s32 1, %v277
        %v279 = vrot.slane %v252, %v278
        %v282 = vmul.f32 %v270, %v275
        %v283 = vmul.f32 %v269, %v279
        %284 = vrot.lane.b32.xlu0 %v251, 112
        %v285 = vpop.permute.xlu0 %284
        %286 = vrot.lane.b32.xlu0 %v260, 112
        %v287 = vpop.permute.xlu0 %286
        %vm288 = vcmp.lt.s32.totalorder %v267, 112
        %v289 = vsel %vm288, %v285, %v287
        %v290 = vsel %vm288, %v287, %v285
        %v292 = vlaneseq
        %v293 = vshrl.u32 %v292, 7
        %v294 = vsub.s32 0, %v293
        %v295 = vrot.slane %v254, %v294
        %v296 = vlaneseq
        %v297 = vshrl.u32 %v296, 7
        %v298 = vsub.s32 1, %v297
        %v299 = vrot.slane %v254, %v298
        %v302 = vmul.f32 %v289, %v295
        %v303 = vmul.f32 %v290, %v299
        %304 = vrot.lane.b32.xlu0 %v282, 1
        %v305 = vpop.permute.xlu0 %304
        %306 = vrot.lane.b32.xlu0 %v283, 1
        %v307 = vpop.permute.xlu0 %306
        %vm308 = vcmp.lt.s32.totalorder %v267, 1
        %v309 = vsel %vm308, %v305, %v307
        %v310 = vsel %vm308, %v307, %v305
        %v311 = vld [vmem:[%s1] sm:$0xf]
        %313 = vset.pattern.permute.xlu0 0
        %314 = vperm.xlu0 %313, %v311
        %v315 = vpop.permute.xlu0 %314
        %v317 = vmul.f32 %v310, %v315
        %v318 = vmul.f32 %v309, %v315
        %v319 = vadd.f32 %v317, 0.0
        %v320 = vadd.f32 %v318, 0.0
        %321 = vrot.lane.b32.xlu0 %v251, 1
        %v322 = vpop.permute.xlu0 %321
        %323 = vrot.lane.b32.xlu0 %v260, 1
        %v324 = vpop.permute.xlu0 %323
        %v325 = vsel %vm308, %v322, %v324
        %v326 = vsel %vm308, %v324, %v322
        %s327 = scalar_lea.vmem %s1, 12
        %v328 = vld [vmem:[%s327] sm:$0xf]
        %330 = vset.pattern.permute.xlu0 0
        %331 = vperm.xlu0 %330, %v328
        %v332 = vpop.permute.xlu0 %331
        %v334 = vmul.f32 %v326, %v332
        %v335 = vmul.f32 %v325, %v332
        %v336 = vadd.f32 %v319, %v334
        %v337 = vadd.f32 %v320, %v335
        %338 = vrot.lane.b32.xlu0 %v302, 1
        %v339 = vpop.permute.xlu0 %338
        %340 = vrot.lane.b32.xlu0 %v303, 1
        %v341 = vpop.permute.xlu0 %340
        %v342 = vsel %vm308, %v339, %v341
        %v343 = vsel %vm308, %v341, %v339
        %s344 = scalar_lea.vmem %s1, 24
        %v345 = vld [vmem:[%s344] sm:$0xf]
        %347 = vset.pattern.permute.xlu0 0
        %348 = vperm.xlu0 %347, %v345
        %v349 = vpop.permute.xlu0 %348
        %v351 = vmul.f32 %v343, %v349
        %v352 = vmul.f32 %v342, %v349
        %v353 = vadd.f32 %v336, %v351
        %v354 = vadd.f32 %v337, %v352
        %v356 = vlaneseq
        %v357 = vshrl.u32 %v356, 7
        %v358 = vsub.s32 0, %v357
        %v359 = vrot.slane %v256, %v358
        %v360 = vlaneseq
        %v361 = vshrl.u32 %v360, 7
        %v362 = vsub.s32 1, %v361
        %v363 = vrot.slane %v256, %v362
        %v366 = vmul.f32 %v353, %v359
        %v367 = vmul.f32 %v354, %v363
        %v368 = vadd.f32 %v366, 0.0
        %v369 = vadd.f32 %v367, 0.0
        %s370 = scalar_lea.vmem %s1, 4
        %v371 = vld [vmem:[%s370] sm:$0xf]
        %373 = vset.pattern.permute.xlu0 0
        %374 = vperm.xlu0 %373, %v371
        %v375 = vpop.permute.xlu0 %374
        %v377 = vmul.f32 %v282, %v375
        %v378 = vmul.f32 %v283, %v375
        %v379 = vadd.f32 %v377, 0.0
        %v380 = vadd.f32 %v378, 0.0
        %s381 = scalar_lea.vmem %s1, 16
        %v382 = vld [vmem:[%s381] sm:$0xf]
        %384 = vset.pattern.permute.xlu0 0
        %385 = vperm.xlu0 %384, %v382
        %v386 = vpop.permute.xlu0 %385
        %v388 = vunpack.c.l.s4 839922192
        %v389 = vunpack.c.0.s8 %v388
        %v390 = vlaneseq
        %v391 = vshrl.u32 %v390, 7
        %v392 = vsub.s32 %v389, %v391
        %v393 = vrot.slane %v386, %v392
        %v395 = vmul.f32 %v251, %v393
        %v397 = vcombine.high %v395, %v395
        %v399 = vadd.f32 %v379, %v395
        %v400 = vadd.f32 %v380, %v397
        %s401 = scalar_lea.vmem %s1, 28
        %v402 = vld [vmem:[%s401] sm:$0xf]
        %404 = vset.pattern.permute.xlu0 0
        %405 = vperm.xlu0 %404, %v402
        %v406 = vpop.permute.xlu0 %405
        %v408 = vmul.f32 %v302, %v406
        %v409 = vmul.f32 %v303, %v406
        %v410 = vadd.f32 %v399, %v408
        %v411 = vadd.f32 %v400, %v409
        %v412 = vadd.f32 %v368, %v410
        %v413 = vadd.f32 %v369, %v411
        %414 = vrot.lane.b32.xlu0 %v282, 127
        %v415 = vpop.permute.xlu0 %414
        %416 = vrot.lane.b32.xlu0 %v283, 127
        %v417 = vpop.permute.xlu0 %416
        %vm418 = vcmp.lt.s32.totalorder %v267, 127
        %v419 = vsel %vm418, %v415, %v417
        %v420 = vsel %vm418, %v417, %v415
        %s421 = scalar_lea.vmem %s1, 8
        %v422 = vld [vmem:[%s421] sm:$0xf]
        %424 = vset.pattern.permute.xlu0 0
        %425 = vperm.xlu0 %424, %v422
        %v426 = vpop.permute.xlu0 %425
        %v428 = vmul.f32 %v419, %v426
        %v429 = vmul.f32 %v420, %v426
        %v430 = vadd.f32 %v428, 0.0
        %v431 = vadd.f32 %v429, 0.0
        %432 = vrot.lane.b32.xlu0 %v251, 127
        %v433 = vpop.permute.xlu0 %432
        %434 = vrot.lane.b32.xlu0 %v260, 127
        %v435 = vpop.permute.xlu0 %434
        %v436 = vsel %vm418, %v433, %v435
        %v437 = vsel %vm418, %v435, %v433
        %s438 = scalar_lea.vmem %s1, 20
        %v439 = vld [vmem:[%s438] sm:$0xf]
        %441 = vset.pattern.permute.xlu0 0
        %442 = vperm.xlu0 %441, %v439
        %v443 = vpop.permute.xlu0 %442
        %v445 = vmul.f32 %v436, %v443
        %v446 = vmul.f32 %v437, %v443
        %v447 = vadd.f32 %v430, %v445
        %v448 = vadd.f32 %v431, %v446
        %449 = vrot.lane.b32.xlu0 %v302, 127
        %v450 = vpop.permute.xlu0 %449
        %451 = vrot.lane.b32.xlu0 %v303, 127
        %v452 = vpop.permute.xlu0 %451
        %v453 = vsel %vm418, %v450, %v452
        %v454 = vsel %vm418, %v452, %v450
        %s455 = scalar_lea.vmem %s1, 32
        %v456 = vld [vmem:[%s455] sm:$0xf]
        %458 = vset.pattern.permute.xlu0 0
        %459 = vperm.xlu0 %458, %v456
        %v460 = vpop.permute.xlu0 %459
        %v462 = vmul.f32 %v453, %v460
        %v463 = vmul.f32 %v454, %v460
        %v464 = vadd.f32 %v447, %v462
        %v465 = vadd.f32 %v448, %v463
        %v467 = vlaneseq
        %v468 = vshrl.u32 %v467, 7
        %v469 = vsub.s32 0, %v468
        %v470 = vrot.slane %v258, %v469
        %v471 = vlaneseq
        %v472 = vshrl.u32 %v471, 7
        %v473 = vsub.s32 1, %v472
        %v474 = vrot.slane %v258, %v473
        %v477 = vmul.f32 %v464, %v470
        %v478 = vmul.f32 %v465, %v474
        %v479 = vadd.f32 %v412, %v477
        %v480 = vadd.f32 %v413, %v478
        %v481 = vld [vmem:[%s2] sm:$0xf]
        %v482 = vpack.c.bf16 %v479, %v479
        %v483 = vpack.c.bf16 %v480, %v480
        %vm484 = vcmask 31744
        %v486 = vsel %vm484, %v481, 0
        %vm488 = vcmask 1041408
        %v490 = vsel %vm488, %v482, 0
        %v493 = vsel %vm488, %v483, 0
        %495 = vmatprep.subr.bf16.mxu0 0
        %496 = vmatpush1.bf16.msra.mxu0 0
        %497 = vmatprep.subr.bf16.mxu0 0
        %498 = vmatpush1.bf16.msra.mxu0 0
        %499 = vmatprep.subr.bf16.mxu0 0
        %500 = vmatpush1.bf16.msra.mxu0 0
        %501 = vmatprep.subr.bf16.mxu0 0
        %502 = vmatpush1.bf16.msra.mxu0 0
        %503 = vmatprep.subr.bf16.mxu0 0
        %504 = vmatpush1.bf16.msra.mxu0 0
        %505 = vmatprep.subr.bf16.mxu0 0
        %506 = vmatpush1.bf16.msra.mxu0 0
        %507 = vmatprep.subr.bf16.mxu0 0
        %508 = vmatpush1.bf16.msra.mxu0 0
        %509 = vmatprep.subr.bf16.mxu0 %v493
        %510 = vmatpush1.bf16.msra.mxu0 %v490
        %511 = vmatprep.subr.bf16.mxu0 0
        %512 = vmatpush2.bf16.msra.mxu0 0
        %513 = vmatprep.subr.bf16.mxu0 0
        %514 = vmatpush2.bf16.msra.mxu0 0
        %515 = vmatprep.subr.bf16.mxu0 0
        %516 = vmatpush2.bf16.msra.mxu0 0
        %517 = vmatprep.subr.bf16.mxu0 0
        %518 = vmatpush2.bf16.msra.mxu0 0
        %519 = vmatprep.subr.bf16.mxu0 0
        %520 = vmatpush2.bf16.msra.mxu0 0
        %521 = vmatprep.subr.bf16.mxu0 0
        %522 = vmatpush2.bf16.msra.mxu0 0
        %523 = vmatprep.subr.bf16.mxu0 0
        %524 = vmatpush2.bf16.msra.mxu0 0
        %525 = vmatprep.subr.bf16.mxu0 0
        %526 = vmatpush2.bf16.msra.mxu0 0
        %527 = vmatprep.mubr.bf16.mxu0 0
        %528 = vmatmul.mubr.bf16.gmra.mxu0 %v486
        %v529 = vpop.f32.mrf.mxu0
        %v530 = vadd.f32 0.0, %v529
        %v531 = vpop.f32.mrf.mxu0
        %v532 = vadd.f32 0.0, %v531
        %v533 = vpop.f32.mrf.mxu0
        %v534 = vpop.f32.mrf.mxu0
        %535 = vdwg.mxu0
        %v536 = vld [vmem:[%s3] sm:$0xff]
        %538 = vset.pattern.permute.xlu0 0
        %539 = vperm.xlu0 %538, %v536
        %v540 = vpop.permute.xlu0 %539
        %v542 = vmul.f32 %v530, %v540
        %v543 = vmul.f32 %v532, %v540
        %v544 = vld [vmem:[%s4] sm:$0xff]
        %546 = vset.pattern.permute.xlu0 0
        %547 = vperm.xlu0 %546, %v544
        %v548 = vpop.permute.xlu0 %547
        %v550 = vadd.f32 %v542, %v548
        %v551 = vadd.f32 %v543, %v548
        %v552 = vmax.f32 %v550, 0.0
        %v553 = vmax.f32 %v551, 0.0
        %554 = vst [vmem:[%s244] sm:$0xff] %v552
        %555 = vst [vmem:[%s244 + $0x8] sm:$0xff] %v553
        %s556 = sand.u32 %s159, 1
        %s557 = scalar_lea.sflag [#allocation3], %s556
        %s558 = sand.u32 %s159, 1
        %s559 = smul.addr %s558, 16
        %s560 = scalar_lea.vmem [#allocation2], %s559
        // Predicated region
        $region45: #{tpu_custom_call.1} parent=43 // pred_check
          %p561 = pneg %p169
        $region46: #{tpu_custom_call.1} parent=43 // pred_check_branch
          %563 = sbr.rel (%p561) target = $region48
        $region47: #{tpu_custom_call.1} parent=43 // pred_region
          %s565 = ssub.s32 256, 256
          %566 = vsyncadd %s557, %s565
          %s567 = smul.addr %s20, 2
          %s568 = smul.addr %s567, 128
          %s569 = scalar_lea.hbm %s6, %s568
          %s571 = sshll.u32 %s560, 4
          %s572 = int_to_ptr.vmem [resolvable:$true] %s571
          %574 = dma.vmem_to_hbm [thread:$0]  %s572, 256, %s569, %s557
        $region48: #{tpu_custom_call.1} parent=43 // pred_fallthru
          _
      $region44: #{tpu_custom_call.1} parent=5 // pred_fallthru
        _
      %p575 = scmp.le.s32.totalorder 2, %s15
      // Predicated region
      $region49: #{tpu_custom_call.1} parent=5 // pred_check
        %p576 = pneg %p575
      $region50: #{tpu_custom_call.1} parent=5 // pred_check_branch
        %578 = sbr.rel (%p576) target = $region52
      $region51: #{tpu_custom_call.1} parent=5 // pred_region
        %s579 = ssub.s32 %s15, 2
        // Predicated region
        $region53: #{tpu_custom_call.1} parent=51 // pred_check
          %p580 = pneg %p175
        $region54: #{tpu_custom_call.1} parent=51 // pred_check_branch
          %582 = sbr.rel (%p580) target = $region56
        $region55: #{tpu_custom_call.1} parent=51 // pred_region
          %s583 = sand.u32 %s160, 1
          %s584 = scalar_lea.sflag [#allocation3], %s583
          %s585 = sand.u32 %s160, 1
          %s586 = smul.addr %s585, 16
          %s587 = scalar_lea.vmem [#allocation2], %s586
          %588 = dma.done %s584, 256
        $region56: #{tpu_custom_call.1} parent=51 // pred_fallthru
          _
      $region52: #{tpu_custom_call.1} parent=5 // pred_fallthru
        _
    $region6: #{tpu_custom_call.1} parent=1 // loop_footer
      %s19 = sadd.s32 1, %s15
    $region7: #{tpu_custom_call.1} parent=1 // loop_footer_branch
      %14 = sbr.rel target = $region3
    $region8: #{tpu_custom_call.1} parent=1 // loop_exit
      _
    %589 = vsyncpa [#allocation3], 1
    %s590 = scalar_lea.sflag [#allocation3], 1
    %591 = vsyncpa %s590, 1

</llo_original>
